<compile_context>
chip_gen: v5e
topology: v5e:2x2
jax: 0.10.0
libtpu: 0.0.40
codegen_flags: <defaults>
</compile_context>

<pallas_src>
import functools

import jax
import jax.numpy as jnp
from jax.experimental import pallas as pl
from jax.experimental.pallas import tpu as pltpu


# ----------------------------------------------------------------------------
# Kernel
# ----------------------------------------------------------------------------
def _flametex_kernel(code_ref, basis_ref, scale_ref, mean_ref, out_ref):
    # code_ref : [B, K]   bf16  (whole array, resident every grid step)
    # basis_ref: [K, TN]  int8  tile of the column-quantized basis
    # scale_ref: [1, TN]  f32   per-column dequant scales
    # mean_ref : [1, TN]  f32   tile of the (pre-permuted) texture mean
    # out_ref  : [B, TN]  f32
    basis = basis_ref[...].astype(jnp.bfloat16)        # int8 values exact in bf16
    acc = jnp.dot(code_ref[...], basis, preferred_element_type=jnp.float32)
    out_ref[...] = acc * scale_ref[...] + mean_ref[...]


# ----------------------------------------------------------------------------
# One-time init-time preprocessing of the constant texture space
# ----------------------------------------------------------------------------
def preprocess_tex_space(texture_basis_t, texture_mean, *, height, width):
    """Fold the forward's layout ops and quantization into the constant buffers.

    * Keeps only the texels that survive the nearest 2x downsample
      (F.interpolate(..., [H//2, W//2], 'nearest') == x[..., ::2, ::2]).
    * Re-orders columns to channel-major, BGR-flipped (c', h, w) so the kernel
      output is already the final NCHW/[2,1,0] layout (post-kernel permute/flip
      become a free reshape).
    * Quantizes the (large) basis to int8 with per-column symmetric scales;
      the mean stays f32 (K x smaller than the basis, precision is free).
    """
    K, N = texture_basis_t.shape
    assert N == height * width * 3
    assert texture_mean.shape == (1, N)

    basis = texture_basis_t.reshape(K, height, width, 3)[:, ::2, ::2, :]
    mean = texture_mean.reshape(1, height, width, 3)[:, ::2, ::2, :]

    # HWC -> CHW with channels reversed ([2, 1, 0]) folded in.
    basis = jnp.transpose(basis, (0, 3, 1, 2))[:, ::-1, :, :].reshape(K, -1)
    mean = jnp.transpose(mean, (0, 3, 1, 2))[:, ::-1, :, :]
    mean = mean.reshape(1, -1).astype(jnp.float32)                  # [1, N']

    # Per-column symmetric int8 quantization (dequant applied post-dot).
    col_absmax = jnp.max(jnp.abs(basis), axis=0, keepdims=True)     # [1, N']
    scale = (jnp.maximum(col_absmax, 1e-12) / 127.0).astype(jnp.float32)
    basis_q = jnp.clip(jnp.round(basis / scale), -127, 127).astype(jnp.int8)
    return basis_q, scale, mean


# ----------------------------------------------------------------------------
# Tiling / VMEM planning (host-side, outside jit)
# ----------------------------------------------------------------------------
def _round_up(x, m):
    return -(-x // m) * m


def _vmem_budget_bytes():
    try:
        cap = int(pltpu.get_tpu_info().vmem_capacity_bytes)
    except Exception:
        cap = 64 << 20  # conservative default: v7x per-TC VMEM
    # Leave headroom for Mosaic internal scratch / semaphores; never request
    # more than ~96 MiB even on 128 MiB parts (v5e/v6e).
    return min(cap - (8 << 20), 96 << 20)


def _plan_tiling(n_cols, hint, k, b):
    budget = _vmem_budget_bytes()
    # Exact per-output-column footprint of the double-buffered pipelined tiles:
    #   basis int8 (k B) + scale f32 (4 B) + mean f32 (4 B) + out f32 (b*4 B)
    per_col = 2 * (k * 1 + 4 + 4 + b * 4)
    code_bytes = b * k * 2  # bf16 texcode, resident (not double-buffered in spirit)

    max_cols = max(512, (budget - code_bytes) // per_col)
    tile = min(hint, max_cols, _round_up(n_cols, 128))
    # Round down to a 128-multiple, but keep a >=512-column floor so awkward
    # shapes never collapse to 128-wide tiles (~30% of HBM roofline).
    tile = max((tile // 128) * 128, min(512, _round_up(n_cols, 128)))

    grid = pl.cdiv(n_cols, tile)
    if grid > 1 and grid % 2:
        # Even tile count -> balanced split across v7x's two TensorCores
        # (no-op cost on single-TC v5e/v6e).
        grid += 1
        tile = max(_round_up(pl.cdiv(n_cols, grid), 128), 128)
        grid = pl.cdiv(n_cols, tile)

    live_bytes = per_col * tile + code_bytes
    vmem_limit = int(min(max(live_bytes + (4 << 20), 16 << 20), budget))
    return tile, grid, vmem_limit


# ----------------------------------------------------------------------------
# Forward
# ----------------------------------------------------------------------------
@functools.partial(
    jax.jit,
    static_argnames=("out_height", "out_width", "tile_n", "grid_n", "vmem_limit"))
def _flametex_call(texcode, basis_q, scale, mean, *, out_height, out_width,
                   tile_n, grid_n, vmem_limit):
    B, K = texcode.shape
    Np = 3 * out_height * out_width
    assert basis_q.shape == (K, Np)
    assert scale.shape == (1, Np) and mean.shape == (1, Np)

    code = texcode.astype(jnp.bfloat16)

    cost = pl.CostEstimate(
        flops=2 * B * K * Np + 2 * B * Np,
        transcendentals=0,
        bytes_accessed=(K * Np * 1        # int8 basis read (dominant stream)
                        + Np * 4          # scales
                        + Np * 4          # mean
                        + B * Np * 4      # output write
                        + B * K * 2))     # texcode

    flat = pl.pallas_call(
        _flametex_kernel,
        out_shape=jax.ShapeDtypeStruct((B, Np), jnp.float32),
        grid_spec=pltpu.PrefetchScalarGridSpec(
            num_scalar_prefetch=0,
            grid=(grid_n,),                                   # ragged last tile OK
            in_specs=[
                pl.BlockSpec((B, K), lambda i: (0, 0)),       # texcode (whole, resident)
                pl.BlockSpec((K, tile_n), lambda i: (0, i)),  # int8 basis tile
                pl.BlockSpec((1, tile_n), lambda i: (0, i)),  # per-column scales
                pl.BlockSpec((1, tile_n), lambda i: (0, i)),  # mean tile
            ],
            out_specs=pl.BlockSpec((B, tile_n), lambda i: (0, i)),
        ),
        compiler_params=pltpu.CompilerParams(
            # "parallel" lets the N axis shard across v7x's two TensorCores;
            # TODO(synk): verify both TCs stream in xprof, else switch to
            # dimension_semantics=(pltpu.CORE_PARALLEL,).
            dimension_semantics=("parallel",),
            vmem_limit_bytes=vmem_limit,
        ),
        cost_estimate=cost,
    )(code, basis_q, scale, mean)

    # Downsample, NCHW permute and BGR flip were folded into the init-time
    # column order, so this reshape is the final answer (no transpose/flip).
    return flat.reshape(B, 3, out_height, out_width)


def flametex_forward(texcode, basis_q, scale, mean, *, out_height, out_width,
                     tile_n_hint=65536):
    """texcode: [B, K] f32; basis_q: [K, N'] int8; scale/mean: [1, N'] f32,
    with N' = 3 * out_height * out_width in (channel-flipped, c-major) order
    as produced by preprocess_tex_space.  Returns [B, 3, out_height, out_width].
    """
    B, K = texcode.shape
    Np = 3 * out_height * out_width
    tile_n, grid_n, vmem_limit = _plan_tiling(Np, tile_n_hint, K, B)
    return _flametex_call(texcode, basis_q, scale, mean,
                          out_height=out_height, out_width=out_width,
                          tile_n=tile_n, grid_n=grid_n, vmem_limit=vmem_limit)


# ----------------------------------------------------------------------------
# Pure-JAX f32 reference mirroring the PyTorch forward exactly
# ----------------------------------------------------------------------------
def _reference_forward(texcode, texture_basis_t, texture_mean, height, width):
    B = texcode.shape[0]
    basis = texture_basis_t.T                                        # [N, K]
    flat = texture_mean + (basis[None] * texcode[:, None, :]).sum(-1)
    tex = flat.reshape(B, height, width, 3)
    tex = jnp.transpose(tex, (0, 3, 1, 2))                           # NCHW
    tex = tex[:, :, ::2, ::2]                                        # nearest 2x down
    tex = tex[:, ::-1, :, :]                                         # channel flip
    return tex


if __name__ == "__main__":
    # Small shapes consistent with the module's math (real model: H=W=512, n_tex<=200).
    B = 2        # batch
    K = 16       # n_tex
    H = W = 32   # texture resolution (module hard-codes 512)
    N = H * W * 3

    key = jax.random.PRNGKey(0)
    k_mean, k_basis, k_code = jax.random.split(key, 3)

    # Deterministic synthetic "buffers" (stand-ins for the .npz texture space).
    texture_mean = jax.random.uniform(k_mean, (1, N), dtype=jnp.float32)          # like mean/255
    texture_basis = 0.01 * jax.random.normal(k_basis, (N, K), dtype=jnp.float32)  # like tex_dir/255
    texture_basis_t = jnp.asarray(texture_basis.T)                                # [K, N]
    texcode = jax.random.normal(k_code, (B, K), dtype=jnp.float32)

    # Init-time preprocessing: downsample + permute + BGR flip folded into the
    # column order, basis quantized to int8 with per-column scales.
    basis_q, scale, mean_ds = preprocess_tex_space(
        texture_basis_t, texture_mean, height=H, width=W)

    out = flametex_forward(texcode, basis_q, scale, mean_ds,
                           out_height=H // 2, out_width=W // 2)
    out = jax.block_until_ready(out)

    assert out.shape == (B, 3, H // 2, W // 2), out.shape
    ref = _reference_forward(texcode, texture_basis_t, texture_mean, H, W)
    # int8 per-column quantized basis + bf16 texcode -> relaxed tolerance
    # (texture values are O(1) colors; error is ~1e-3 worst-case here).
    assert jnp.allclose(out, ref, atol=2e-2, rtol=2e-2), float(jnp.max(jnp.abs(out - ref)))

    print("KERNEL_OK")
</pallas_src>

<mosaic_0001>
module attributes {stable_mosaic.version = 11 : i64} {
  func.func @_flametex_kernel(%arg0: i32, %arg1: memref<2x16xbf16, #tpu.memory_space<vmem>>, %arg2: memref<16x768xi8, #tpu.memory_space<vmem>>, %arg3: memref<1x768xf32, #tpu.memory_space<vmem>>, %arg4: memref<1x768xf32, #tpu.memory_space<vmem>>, %arg5: memref<2x768xf32, #tpu.memory_space<vmem>>) attributes {dimension_semantics = [#tpu.dimension_semantics<parallel>], iteration_bounds = array<i64: 1>, scalar_prefetch = 0 : i64, scratch_operands = 0 : i64, tpu.core_type = #tpu.core_type<tc>, window_params = [{pipeline_mode = #tpu.pipeline_mode<synchronous>, transform_indices = @transform_0, window_bounds = array<i64: 2, 16>}, {transform_indices = @transform_1, window_bounds = array<i64: 16, 768>}, {transform_indices = @transform_2, window_bounds = array<i64: 1, 768>}, {transform_indices = @transform_3, window_bounds = array<i64: 1, 768>}, {transform_indices = @transform_4, window_bounds = array<i64: 2, 768>}]} {
    %c0 = arith.constant 0 : index
    %c0_0 = arith.constant 0 : index
    %0 = vector.load %arg2[%c0, %c0_0] : memref<16x768xi8, #tpu.memory_space<vmem>>, vector<16x768xi8>
    %1 = arith.sitofp %0 : vector<16x768xi8> to vector<16x768xbf16>
    %c0_1 = arith.constant 0 : index
    %c0_2 = arith.constant 0 : index
    %2 = vector.load %arg1[%c0_1, %c0_2] : memref<2x16xbf16, #tpu.memory_space<vmem>>, vector<2x16xbf16>
    %cst = arith.constant dense<0.000000e+00> : vector<2x768xf32>
    %3 = tpu.matmul %2, %1, %cst {dimension_numbers = #tpu.dot_dimension_numbers<[1], [0], [0], [1], [0, 0, 1, 1], [], []>} : vector<2x16xbf16>, vector<16x768xbf16>, vector<2x768xf32> -> vector<2x768xf32>
    %c0_3 = arith.constant 0 : index
    %c0_4 = arith.constant 0 : index
    %4 = vector.load %arg3[%c0_3, %c0_4] : memref<1x768xf32, #tpu.memory_space<vmem>>, vector<1x768xf32>
    %5 = vector.broadcast %4 : vector<1x768xf32> to vector<2x768xf32>
    %6 = arith.mulf %3, %5 : vector<2x768xf32>
    %c0_5 = arith.constant 0 : index
    %c0_6 = arith.constant 0 : index
    %7 = vector.load %arg4[%c0_5, %c0_6] : memref<1x768xf32, #tpu.memory_space<vmem>>, vector<1x768xf32>
    %8 = vector.broadcast %7 : vector<1x768xf32> to vector<2x768xf32>
    %9 = arith.addf %6, %8 : vector<2x768xf32>
    %c0_7 = arith.constant 0 : index
    %c0_8 = arith.constant 0 : index
    %10 = vector.load %arg5[%c0_7, %c0_8] : memref<2x768xf32, #tpu.memory_space<vmem>>, vector<2x768xf32>
    tpu.vector_store %arg5[%c0_7, %c0_8], %9 {strides = array<i32>} : memref<2x768xf32, #tpu.memory_space<vmem>>, vector<2x768xf32>,
    return
  }
  func.func @transform_0(%arg0: i32) -> (i32, i32) {
    %c0_i32 = arith.constant 0 : i32
    %c0_i32_0 = arith.constant 0 : i32
    %c0_i32_1 = arith.constant 0 : i32
    return %c0_i32, %c0_i32_0 : i32, i32
  }
  func.func @transform_1(%arg0: i32) -> (i32, i32) {
    %c0_i32 = arith.constant 0 : i32
    %c0_i32_0 = arith.constant 0 : i32
    return %c0_i32, %arg0 : i32, i32
  }
  func.func @transform_2(%arg0: i32) -> (i32, i32) {
    %c0_i32 = arith.constant 0 : i32
    %c0_i32_0 = arith.constant 0 : i32
    return %c0_i32, %arg0 : i32, i32
  }
  func.func @transform_3(%arg0: i32) -> (i32, i32) {
    %c0_i32 = arith.constant 0 : i32
    %c0_i32_0 = arith.constant 0 : i32
    return %c0_i32, %arg0 : i32, i32
  }
  func.func @transform_4(%arg0: i32) -> (i32, i32) {
    %c0_i32 = arith.constant 0 : i32
    %c0_i32_0 = arith.constant 0 : i32
    return %c0_i32, %arg0 : i32, i32
  }
}

</mosaic_0001>

<llo_original>
// kernel: _flametex_call.1
$region0: #{_flametex_call.1}
  #allocation0 [shape = 'u32[]', space=smem, size = 0x4, offset = 0x4, fixed_abs, tag = 'smem constant byte address 0x4 - core index']
  #allocation1 [shape = 'u32[72,128]{1,0:T(1,128)}', space=vmem, size = 0x9000, scoped, tag = 'internal scratch']
  %s0 = inlined_call_operand.vmem [shape: bf16[2,16], index: 0, kind: input, shape index: {}]
  %s1 = inlined_call_operand.hbm [shape: s8[16,768], index: 1, kind: input, shape index: {}]
  %s2 = inlined_call_operand.hbm [shape: f32[1,768], index: 2, kind: input, shape index: {}]
  %s3 = inlined_call_operand.hbm [shape: f32[1,768], index: 3, kind: input, shape index: {}]
  %s4 = inlined_call_operand.vmem [shape: f32[2,768], index: 4, kind: output, shape index: {}]
  %s5 = sld [smem:[#allocation0]]
  $region38: #{_flametex_call.1} parent=0
    _
  %s7 = ssub.s32 1, %s5
  %s8 = scalar_select 0, %s7, %s5
  $region1: #{_flametex_call.1} parent=0
    #allocation2 [shape = 'u8[12288]{0}', space=vmem, size = 0x3000, scoped, tag = 'input window, operand 1, single buffered']
    #allocation3 [shape = 's32[1]{0}', space=sflag, size = 0x4, scoped, tag = 'scoped memory for _flametex_call.1']
    #allocation4 [shape = 'u8[3072]{0}', space=vmem, size = 0xc00, scoped, tag = 'input window, operand 2, single buffered']
    #allocation5 [shape = 's32[1]{0}', space=sflag, size = 0x4, scoped, tag = 'scoped memory for _flametex_call.1']
    #allocation6 [shape = 'u8[3072]{0}', space=vmem, size = 0xc00, scoped, tag = 'input window, operand 3, single buffered']
    %9 = vsyncpa [#allocation3], 0
    %10 = vsyncpa [#allocation5], 0
    // Predicated region
    $region2: #{_flametex_call.1} parent=1 // pred_check
      _
    $region3: #{_flametex_call.1} parent=1 // pred_check_branch
      %12 = sbr.rel (0) target = $region5
    $region4: #{_flametex_call.1} parent=1 // pred_region
      _
    $region5: #{_flametex_call.1} parent=1 // pred_fallthru
      _
    // Predicated region
    $region6: #{_flametex_call.1} parent=1 // pred_check
      _
    $region7: #{_flametex_call.1} parent=1 // pred_check_branch
      %14 = sbr.rel (0) target = $region9
    $region8: #{_flametex_call.1} parent=1 // pred_region
      %16 = vsyncadd [#allocation3], 0
      %s17 = sshll.u32 %s1, 4
      %s18 = int_to_ptr.hbm [resolvable:$true] %s17
      %s19 = sshll.u32 [#allocation2], 4
      %s20 = int_to_ptr.vmem [resolvable:$true] %s19
      %25 = dma.hbm_to_vmem [thread:$0]  %s18, 384, %s20, [#allocation3], 192, 192, 12
    $region9: #{_flametex_call.1} parent=1 // pred_fallthru
      _
    // Predicated region
    $region10: #{_flametex_call.1} parent=1 // pred_check
      _
    $region11: #{_flametex_call.1} parent=1 // pred_check_branch
      %27 = sbr.rel (0) target = $region13
    $region12: #{_flametex_call.1} parent=1 // pred_region
      %29 = vsyncadd [#allocation5], 0
      %s31 = sshll.u32 %s2, 4
      %s32 = int_to_ptr.hbm [resolvable:$true] %s31
      %s33 = sshll.u32 [#allocation4], 4
      %s34 = int_to_ptr.vmem [resolvable:$true] %s33
      %36 = dma.hbm_to_vmem [thread:$0]  %s32, 96, %s34, [#allocation5]
    $region13: #{_flametex_call.1} parent=1 // pred_fallthru
      _
    // Predicated region
    $region14: #{_flametex_call.1} parent=1 // pred_check
      _
    $region15: #{_flametex_call.1} parent=1 // pred_check_branch
      %38 = sbr.rel (0) target = $region17
    $region16: #{_flametex_call.1} parent=1 // pred_region
      %40 = vsyncadd [#allocation5], 0
      %s42 = sshll.u32 %s3, 4
      %s43 = int_to_ptr.hbm [resolvable:$true] %s42
      %s44 = sshll.u32 [#allocation6], 4
      %s45 = int_to_ptr.vmem [resolvable:$true] %s44
      %47 = dma.hbm_to_vmem [thread:$0]  %s43, 96, %s45, [#allocation5]
    $region17: #{_flametex_call.1} parent=1 // pred_fallthru
      _
    // Predicated region
    $region18: #{_flametex_call.1} parent=1 // pred_check
      _
    $region19: #{_flametex_call.1} parent=1 // pred_check_branch
      %49 = sbr.rel (0) target = $region21
    $region20: #{_flametex_call.1} parent=1 // pred_region
      %51 = dma.done [#allocation3], 384
    $region21: #{_flametex_call.1} parent=1 // pred_fallthru
      _
    // Predicated region
    $region22: #{_flametex_call.1} parent=1 // pred_check
      _
    $region23: #{_flametex_call.1} parent=1 // pred_check_branch
      %53 = sbr.rel (0) target = $region25
    $region24: #{_flametex_call.1} parent=1 // pred_region
      %55 = dma.done [#allocation5], 96
    $region25: #{_flametex_call.1} parent=1 // pred_fallthru
      _
    // Predicated region
    $region26: #{_flametex_call.1} parent=1 // pred_check
      _
    $region27: #{_flametex_call.1} parent=1 // pred_check_branch
      %57 = sbr.rel (0) target = $region29
    $region28: #{_flametex_call.1} parent=1 // pred_region
      %59 = dma.done [#allocation5], 96
    $region29: #{_flametex_call.1} parent=1 // pred_fallthru
      _
    %v61 = vld [vmem:[#allocation2] sm:$0xff]
    %v62 = vld [vmem:[#allocation2 + $0x8] sm:$0xf]
    %v63 = vld [vmem:[#allocation2 + $0xc] sm:$0xff]
    %v64 = vld [vmem:[#allocation2 + $0x14] sm:$0xf]
    %v65 = vunpack.c.0.s8 %v61
    %v66 = vunpack.c.1.s8 %v61
    %v67 = vunpack.c.2.s8 %v61
    %v68 = vunpack.c.3.s8 %v61
    %v69 = vunpack.c.0.s8 %v62
    %v70 = vunpack.c.1.s8 %v62
    %v71 = vunpack.c.0.s8 %v63
    %v72 = vunpack.c.1.s8 %v63
    %v73 = vunpack.c.2.s8 %v63
    %v74 = vunpack.c.3.s8 %v63
    %v75 = vunpack.c.0.s8 %v64
    %v76 = vunpack.c.1.s8 %v64
    %v77 = vcvt.s32.f32 %v65
    %v78 = vcvt.s32.f32 %v66
    %v79 = vcvt.s32.f32 %v67
    %v80 = vcvt.s32.f32 %v68
    %v81 = vcvt.s32.f32 %v69
    %v82 = vcvt.s32.f32 %v70
    %v83 = vcvt.s32.f32 %v71
    %v84 = vcvt.s32.f32 %v72
    %v85 = vcvt.s32.f32 %v73
    %v86 = vcvt.s32.f32 %v74
    %v87 = vcvt.s32.f32 %v75
    %v88 = vcvt.s32.f32 %v76
    %v89 = vpack.c.bf16 %v83, %v77
    %v90 = vpack.c.bf16 %v84, %v78
    %v91 = vpack.c.bf16 %v85, %v79
    %v92 = vpack.c.bf16 %v86, %v80
    %v93 = vpack.c.bf16 %v87, %v81
    %v94 = vpack.c.bf16 %v88, %v82
    %v95 = vld [vmem:[%s0] sm:$0x1]
    %vm96 = vcmask 130048
    %v98 = vsel %vm96, %v95, 0
    %100 = vmatpush.bf16.msra.mxu0 0
    %101 = vmatpush.bf16.msra.mxu0 0
    %102 = vmatpush.bf16.msra.mxu0 0
    %103 = vmatpush.bf16.msra.mxu0 0
    %104 = vmatpush.bf16.msra.mxu0 0
    %105 = vmatpush.bf16.msra.mxu0 0
    %106 = vmatpush.bf16.msra.mxu0 0
    %107 = vmatpush.bf16.msra.mxu0 %v89
    %108 = vmatmul.bf16.gmra.mxu0 %v98
    %v109 = vpop.f32.mrf.mxu0
    %v110 = vadd.f32 0.0, %v109
    %v111 = vpop.f32.mrf.mxu0
    %112 = vdwg.mxu0
    %113 = vmatpush.bf16.msra.mxu0 0
    %114 = vmatpush.bf16.msra.mxu0 0
    %115 = vmatpush.bf16.msra.mxu0 0
    %116 = vmatpush.bf16.msra.mxu0 0
    %117 = vmatpush.bf16.msra.mxu0 0
    %118 = vmatpush.bf16.msra.mxu0 0
    %119 = vmatpush.bf16.msra.mxu0 0
    %120 = vmatpush.bf16.msra.mxu0 %v90
    %121 = vmatmul.bf16.gmra.mxu0 %v98
    %v122 = vpop.f32.mrf.mxu0
    %v123 = vadd.f32 0.0, %v122
    %v124 = vpop.f32.mrf.mxu0
    %125 = vdwg.mxu0
    %126 = vmatpush.bf16.msra.mxu0 0
    %127 = vmatpush.bf16.msra.mxu0 0
    %128 = vmatpush.bf16.msra.mxu0 0
    %129 = vmatpush.bf16.msra.mxu0 0
    %130 = vmatpush.bf16.msra.mxu0 0
    %131 = vmatpush.bf16.msra.mxu0 0
    %132 = vmatpush.bf16.msra.mxu0 0
    %133 = vmatpush.bf16.msra.mxu0 %v91
    %134 = vmatmul.bf16.gmra.mxu0 %v98
    %v135 = vpop.f32.mrf.mxu0
    %v136 = vadd.f32 0.0, %v135
    %v137 = vpop.f32.mrf.mxu0
    %138 = vdwg.mxu0
    %139 = vmatpush.bf16.msra.mxu0 0
    %140 = vmatpush.bf16.msra.mxu0 0
    %141 = vmatpush.bf16.msra.mxu0 0
    %142 = vmatpush.bf16.msra.mxu0 0
    %143 = vmatpush.bf16.msra.mxu0 0
    %144 = vmatpush.bf16.msra.mxu0 0
    %145 = vmatpush.bf16.msra.mxu0 0
    %146 = vmatpush.bf16.msra.mxu0 %v92
    %147 = vmatmul.bf16.gmra.mxu0 %v98
    %v148 = vpop.f32.mrf.mxu0
    %v149 = vadd.f32 0.0, %v148
    %v150 = vpop.f32.mrf.mxu0
    %151 = vdwg.mxu0
    %152 = vmatpush.bf16.msra.mxu0 0
    %153 = vmatpush.bf16.msra.mxu0 0
    %154 = vmatpush.bf16.msra.mxu0 0
    %155 = vmatpush.bf16.msra.mxu0 0
    %156 = vmatpush.bf16.msra.mxu0 0
    %157 = vmatpush.bf16.msra.mxu0 0
    %158 = vmatpush.bf16.msra.mxu0 0
    %159 = vmatpush.bf16.msra.mxu0 %v93
    %160 = vmatmul.bf16.gmra.mxu0 %v98
    %v161 = vpop.f32.mrf.mxu0
    %v162 = vadd.f32 0.0, %v161
    %v163 = vpop.f32.mrf.mxu0
    %164 = vdwg.mxu0
    %165 = vmatpush.bf16.msra.mxu0 0
    %166 = vmatpush.bf16.msra.mxu0 0
    %167 = vmatpush.bf16.msra.mxu0 0
    %168 = vmatpush.bf16.msra.mxu0 0
    %169 = vmatpush.bf16.msra.mxu0 0
    %170 = vmatpush.bf16.msra.mxu0 0
    %171 = vmatpush.bf16.msra.mxu0 0
    %172 = vmatpush.bf16.msra.mxu0 %v94
    %173 = vmatmul.bf16.gmra.mxu0 %v98
    %v174 = vpop.f32.mrf.mxu0
    %v175 = vadd.f32 0.0, %v174
    %v176 = vpop.f32.mrf.mxu0
    %177 = vdwg.mxu0
    %v178 = vld [vmem:[#allocation4] sm:$0x3f]
    %v180 = vperm.slane %v178, 0
    %v181 = vperm.slane %v178, 1
    %v182 = vperm.slane %v178, 2
    %v183 = vperm.slane %v178, 3
    %v184 = vperm.slane %v178, 4
    %v185 = vperm.slane %v178, 5
    %v192 = vmul.f32 %v110, %v180
    %v193 = vmul.f32 %v123, %v181
    %v194 = vmul.f32 %v136, %v182
    %v195 = vmul.f32 %v149, %v183
    %v196 = vmul.f32 %v162, %v184
    %v197 = vmul.f32 %v175, %v185
    %v198 = vld [vmem:[#allocation6] sm:$0x3f]
    %v200 = vperm.slane %v198, 0
    %v201 = vperm.slane %v198, 1
    %v202 = vperm.slane %v198, 2
    %v203 = vperm.slane %v198, 3
    %v204 = vperm.slane %v198, 4
    %v205 = vperm.slane %v198, 5
    %v212 = vadd.f32 %v192, %v200
    %v213 = vadd.f32 %v193, %v201
    %v214 = vadd.f32 %v194, %v202
    %v215 = vadd.f32 %v195, %v203
    %v216 = vadd.f32 %v196, %v204
    %v217 = vadd.f32 %v197, %v205
    %v224 = vrot.slane %v213, 6
    %v225 = vrot.slane %v214, 4
    %v226 = vrot.slane %v215, 2
    %v227 = vrot.slane %v217, 6
    %vm228 = vcmask 1041408
    %v229 = vsel %vm228, %v212, %v224
    %vm230 = vcmask 1045508
    %v231 = vsel %vm230, %v225, %v226
    %vm232 = vcmask 1043456
    %v233 = vsel %vm232, %v229, %v231
    %v234 = vsel %vm228, %v216, %v227
    %237 = vst [vmem:[%s4] sm:$0xff] %v233
    %238 = vst [vmem:[%s4 + $0x8] sm:$0xf] %v234
    // Predicated region
    $region30: #{_flametex_call.1} parent=1 // pred_check
      _
    $region31: #{_flametex_call.1} parent=1 // pred_check_branch
      %240 = sbr.rel (0) target = $region33
    $region32: #{_flametex_call.1} parent=1 // pred_region
      _
    $region33: #{_flametex_call.1} parent=1 // pred_fallthru
      _
    // Predicated region
    $region34: #{_flametex_call.1} parent=1 // pred_check
      _
    $region35: #{_flametex_call.1} parent=1 // pred_check_branch
      %242 = sbr.rel (0) target = $region37
    $region36: #{_flametex_call.1} parent=1 // pred_region
      _
    $region37: #{_flametex_call.1} parent=1 // pred_fallthru
      _
    %243 = vsyncpa [#allocation3], 1
    %244 = vsyncpa [#allocation5], 1

</llo_original>
